<compile_context>
chip_gen: v6e
topology: v6e:2x2x1
jax: 0.10.0
libtpu: 0.0.40
codegen_flags: <defaults>
</compile_context>

<pallas_src>
import functools

import jax
import jax.numpy as jnp
from jax.experimental import pallas as pl
from jax.experimental.pallas import tpu as pltpu

# per-head output widths, in forward() return order
HEAD_DIMS = (2, 2, 6, 6, 26, 71, 36, 6, 12, 18, 45, 26)  # sums to 256
TOTAL_HEAD_DIM = sum(HEAD_DIMS)                           # 256 — lane aligned

_SMALL_BATCH_XLA_CUTOFF = 64


# ---------------------------------------------------------------------------
# Kernel: cast-in-kernel bf16 MXU matmul on the folded weight + f32 bias add.
# ---------------------------------------------------------------------------
def _fashion_head_kernel(x_ref, w_ref, b_ref, out_ref):
    """x:[tb,2H] f32, w:[2H,256] bf16 (resident), b:[1,256] f32, out:[tb,256]."""
    x_bf16 = x_ref[...].astype(jnp.bfloat16)          # cast fused into the kernel
    acc = jnp.dot(x_bf16, w_ref[...], preferred_element_type=jnp.float32)
    out_ref[...] = (acc + b_ref[...]).astype(out_ref.dtype)   # f32 VPU epilogue


# ---------------------------------------------------------------------------
# One-time parameter folding (exact: no activation between aggregator & heads).
# ---------------------------------------------------------------------------
def fold_params(wa_t, ba, wh_t, bh):
    """wa_t:[2H,2H] ba:[2H] wh_t:[2H,256] bh:[256] -> (w_fused bf16, b_fused f32)."""
    wa_t = wa_t.astype(jnp.float32)
    wh_t = wh_t.astype(jnp.float32)
    w_fused = (wa_t @ wh_t).astype(jnp.bfloat16)                          # [2H,256]
    b_fused = (ba.astype(jnp.float32) @ wh_t + bh.astype(jnp.float32))    # [256]
    return w_fused, b_fused.astype(jnp.float32)


def _pick_tile_b(batch):
    # Large batch: big tiles amortize per-step pipeline overhead, but keep
    # >= 2 grid steps above 512 rows so a 2-TC chip (v7x) can split the batch.
    if batch >= 1024:
        return 512
    if batch >= 512:
        return 256
    if batch >= 256:
        return 128
    # Single-block small batch: round to bf16 sublane packing (16 rows / vreg).
    return max(16, ((batch + 15) // 16) * 16)


# ---------------------------------------------------------------------------
# Fused [B, 256] forward — the lane-dense production interface.
# ---------------------------------------------------------------------------
@functools.partial(jax.jit, static_argnames=("out_dtype", "core_parallel"))
def fashion_encoder_head_v2_fused(concat_vector, w_fused, b_fused, *,
                                  out_dtype=jnp.float32, core_parallel=False):
    B, two_h = concat_vector.shape
    bias_row = b_fused.reshape(1, -1).astype(jnp.float32)

    # Tiny batches: launch overhead dominates — one XLA dot is cheaper.
    if B <= _SMALL_BATCH_XLA_CUTOFF:
        acc = jnp.dot(concat_vector.astype(jnp.bfloat16), w_fused,
                      preferred_element_type=jnp.float32)
        return (acc + bias_row).astype(out_dtype)

    tile_b = _pick_tile_b(B)
    grid_b = pl.cdiv(B, tile_b)          # ragged last block handled by masking

    out_itemsize = jnp.dtype(out_dtype).itemsize
    cost = pl.CostEstimate(
        flops=2 * B * two_h * TOTAL_HEAD_DIM,
        transcendentals=0,
        bytes_accessed=(
            B * two_h * concat_vector.dtype.itemsize   # x (producer dtype, no cast pass)
            + two_h * TOTAL_HEAD_DIM * 2               # folded weight (bf16)
            + TOTAL_HEAD_DIM * 4                       # bias (f32)
            + B * TOTAL_HEAD_DIM * out_itemsize        # output
        ),
    )

    # TODO(synk): auto-detect chip generation; CORE_PARALLEL is the v7x 2-TC path.
    batch_sem = pltpu.CORE_PARALLEL if core_parallel else pltpu.PARALLEL

    return pl.pallas_call(
        _fashion_head_kernel,
        out_shape=jax.ShapeDtypeStruct((B, TOTAL_HEAD_DIM), out_dtype),
        grid=(grid_b,),
        in_specs=[
            # x tiled over batch; folded weight & bias resident across all steps
            pl.BlockSpec((tile_b, two_h), lambda b: (b, 0)),
            pl.BlockSpec((two_h, TOTAL_HEAD_DIM), lambda b: (0, 0)),
            pl.BlockSpec((1, TOTAL_HEAD_DIM), lambda b: (0, 0)),
        ],
        out_specs=pl.BlockSpec((tile_b, TOTAL_HEAD_DIM), lambda b: (b, 0)),
        compiler_params=pltpu.CompilerParams(
            dimension_semantics=(batch_sem,),
        ),
        cost_estimate=cost,
    )(concat_vector, w_fused, bias_row)


# ---------------------------------------------------------------------------
# Module-compatible forward: returns the 12 per-head logits tensors.
# NOTE: per-head slices are lane-sparse (widths 2..71); production consumers
# should take the fused [B, 256] slab + HEAD_DIMS offsets instead.
# ---------------------------------------------------------------------------
def fashion_encoder_head_v2(concat_vector, w_fused, b_fused):
    fused = fashion_encoder_head_v2_fused(concat_vector, w_fused, b_fused)
    outs, off = [], 0
    for d in HEAD_DIMS:
        outs.append(fused[:, off:off + d])
        off += d
    return tuple(outs)


# ---------------------------------------------------------------------------
# Param init (PyTorch nn.Linear style) and pure-JAX f32 reference.
# ---------------------------------------------------------------------------
def init_params(hidden_dim, key):
    """Uniform +/- 1/sqrt(fan_in), weights stored pre-transposed to [in, out]."""
    two_h = 2 * hidden_dim
    ks = jax.random.split(key, 4)
    bound = 1.0 / jnp.sqrt(two_h)

    wa = jax.random.uniform(ks[0], (two_h, two_h), jnp.float32, -bound, bound)
    ba = jax.random.uniform(ks[1], (two_h,), jnp.float32, -bound, bound)
    wh = jax.random.uniform(ks[2], (TOTAL_HEAD_DIM, two_h), jnp.float32, -bound, bound)
    bh = jax.random.uniform(ks[3], (TOTAL_HEAD_DIM,), jnp.float32, -bound, bound)
    return wa.T, ba, wh.T, bh


def reference_forward(concat_vector, wa_t, ba, wh_t, bh):
    """Unfolded f32 reference of the PyTorch forward (two matmuls)."""
    agg = concat_vector @ wa_t + ba
    fused = agg @ wh_t + bh
    outs, off = [], 0
    for d in HEAD_DIMS:
        outs.append(fused[:, off:off + d])
        off += d
    return tuple(outs)


if __name__ == "__main__":
    hidden_dim = 32          # concat_vector has 2*hidden_dim = 64 features
    batch = 300              # > XLA cutoff, non-multiple of tile -> exercises
                             # the pallas path with a ragged (masked) last block

    key = jax.random.PRNGKey(0)
    k_x, k_p = jax.random.split(key)

    concat_vector = jax.random.normal(k_x, (batch, 2 * hidden_dim), jnp.float32)
    wa_t, ba, wh_t, bh = init_params(hidden_dim, k_p)

    # one-time fold of aggregator + heads into a single [2H, 256] bf16 weight
    w_fused, b_fused = fold_params(wa_t, ba, wh_t, bh)

    # production interface: fused lane-dense [B, 256] slab
    fused = fashion_encoder_head_v2_fused(concat_vector, w_fused, b_fused)
    fused = jax.block_until_ready(fused)
    assert fused.shape == (batch, TOTAL_HEAD_DIM), fused.shape

    # module-compatible 12-tuple (slicing done host-side, outside the kernel)
    outs = fashion_encoder_head_v2(concat_vector, w_fused, b_fused)
    outs = jax.block_until_ready(outs)

    # correctness check vs unfolded f32 reference (bf16 MXU inputs -> loose tol)
    refs = reference_forward(concat_vector, wa_t, ba, wh_t, bh)
    for o, r, d in zip(outs, refs, HEAD_DIMS):
        assert o.shape == (batch, d), (o.shape, d)
        assert jnp.allclose(o, r, atol=3e-2, rtol=3e-2), "mismatch vs reference"

    print("KERNEL_OK")
</pallas_src>

<mosaic_0001>
module attributes {stable_mosaic.version = 11 : i64} {
  func.func @_fashion_head_kernel(%arg0: i32, %arg1: memref<128x64xf32, #tpu.memory_space<vmem>>, %arg2: memref<64x256xbf16, #tpu.memory_space<vmem>>, %arg3: memref<1x256xf32, #tpu.memory_space<vmem>>, %arg4: memref<128x256xf32, #tpu.memory_space<vmem>>) attributes {dimension_semantics = [#tpu.dimension_semantics<parallel>], iteration_bounds = array<i64: 3>, scalar_prefetch = 0 : i64, scratch_operands = 0 : i64, tpu.core_type = #tpu.core_type<tc>, window_params = [{transform_indices = @transform_0, window_bounds = array<i64: 128, 64>}, {pipeline_mode = #tpu.pipeline_mode<synchronous>, transform_indices = @transform_1, window_bounds = array<i64: 64, 256>}, {pipeline_mode = #tpu.pipeline_mode<synchronous>, transform_indices = @transform_2, window_bounds = array<i64: 1, 256>}, {transform_indices = @transform_3, window_bounds = array<i64: 128, 256>}]} {
    %c0 = arith.constant 0 : index
    %c0_0 = arith.constant 0 : index
    %0 = vector.load %arg1[%c0, %c0_0] : memref<128x64xf32, #tpu.memory_space<vmem>>, vector<128x64xf32>
    %1 = arith.truncf %0 : vector<128x64xf32> to vector<128x64xbf16>
    %c0_1 = arith.constant 0 : index
    %c0_2 = arith.constant 0 : index
    %2 = vector.load %arg2[%c0_1, %c0_2] : memref<64x256xbf16, #tpu.memory_space<vmem>>, vector<64x256xbf16>
    %cst = arith.constant dense<0.000000e+00> : vector<128x256xf32>
    %3 = tpu.matmul %1, %2, %cst {dimension_numbers = #tpu.dot_dimension_numbers<[1], [0], [0], [1], [0, 0, 1, 1], [], []>} : vector<128x64xbf16>, vector<64x256xbf16>, vector<128x256xf32> -> vector<128x256xf32>
    %c0_3 = arith.constant 0 : index
    %c0_4 = arith.constant 0 : index
    %4 = vector.load %arg3[%c0_3, %c0_4] : memref<1x256xf32, #tpu.memory_space<vmem>>, vector<1x256xf32>
    %5 = vector.broadcast %4 : vector<1x256xf32> to vector<128x256xf32>
    %6 = arith.addf %3, %5 : vector<128x256xf32>
    %c0_5 = arith.constant 0 : index
    %c0_6 = arith.constant 0 : index
    %7 = vector.load %arg4[%c0_5, %c0_6] : memref<128x256xf32, #tpu.memory_space<vmem>>, vector<128x256xf32>
    tpu.vector_store %arg4[%c0_5, %c0_6], %6 {strides = array<i32>} : memref<128x256xf32, #tpu.memory_space<vmem>>, vector<128x256xf32>,
    return
  }
  func.func @transform_0(%arg0: i32) -> (i32, i32) {
    %c0_i32 = arith.constant 0 : i32
    %c0_i32_0 = arith.constant 0 : i32
    return %arg0, %c0_i32 : i32, i32
  }
  func.func @transform_1(%arg0: i32) -> (i32, i32) {
    %c0_i32 = arith.constant 0 : i32
    %c0_i32_0 = arith.constant 0 : i32
    %c0_i32_1 = arith.constant 0 : i32
    return %c0_i32, %c0_i32_0 : i32, i32
  }
  func.func @transform_2(%arg0: i32) -> (i32, i32) {
    %c0_i32 = arith.constant 0 : i32
    %c0_i32_0 = arith.constant 0 : i32
    %c0_i32_1 = arith.constant 0 : i32
    return %c0_i32, %c0_i32_0 : i32, i32
  }
  func.func @transform_3(%arg0: i32) -> (i32, i32) {
    %c0_i32 = arith.constant 0 : i32
    %c0_i32_0 = arith.constant 0 : i32
    return %arg0, %c0_i32 : i32, i32
  }
}

</mosaic_0001>

<llo_original>
// kernel: fashion_encoder_head_v2_fused.1
$region0: #{fashion_encoder_head_v2_fused.1}
  #allocation0 [shape = 'u32[]', space=smem, size = 0x4, offset = 0x4, fixed_abs, tag = 'smem constant byte address 0x4 - core index']
  #allocation1 [shape = 'u32[144,128]{1,0:T(1,128)}', space=vmem, size = 0x12000, scoped, tag = 'internal scratch']
  %s0 = inlined_call_operand.vmem [shape: f32[300,64], index: 0, kind: input, shape index: {}]
  %s1 = inlined_call_operand.vmem [shape: bf16[64,256], index: 1, kind: input, shape index: {}]
  %s2 = inlined_call_operand.vmem [shape: f32[1,256], index: 2, kind: input, shape index: {}]
  %s3 = inlined_call_operand.hbm [shape: f32[300,256], index: 3, kind: output, shape index: {}]
  %s4 = sld [smem:[#allocation0]]
  $region45: #{fashion_encoder_head_v2_fused.1} parent=0
    _
  %s6 = ssub.s32 1, %s4
  %s7 = scalar_select 0, %s6, %s4
  $region1: #{fashion_encoder_head_v2_fused.1} parent=0
    #allocation2 [shape = 'u8[262144]{0}', space=vmem, size = 0x40000, scoped, tag = 'output window, operand 0']
    #allocation3 [shape = 's32[2]{0}', space=sflag, size = 0x8, scoped, tag = 'scoped memory for fashion_encoder_head_v2_fused.1']
    %8 = vsyncpa [#allocation3], 0
    %s9 = scalar_lea.sflag [#allocation3], 1
    %10 = vsyncpa %s9, 0
    loop: start=0, step=1, limit=5
    $region2: #{fashion_encoder_head_v2_fused.1} parent=1 // loop_pre_header
      _
    $region3: #{fashion_encoder_head_v2_fused.1} parent=1 // loop_header
      %s12 = sphi 0, %s16
      %p13 = scmp.ge.s32.totalorder %s12, 5
      %s22 = sphi 0, %s24
      %s25 = sphi 0, %s22
      %s26 = sphi 0, %s25
      %s42 = sphi 0, %s26
      %s46 = sphi 0, %s46
      %s48 = sphi 0, %s46
      %s49 = sphi 0, %s48
      %s63 = sphi 0, %s49
      %s67 = sphi 0, %s67
      %s69 = sphi 0, %s67
      %s70 = sphi 0, %s69
      %s84 = sphi 0, %s70
      %s90 = sphi 0, %s92
      %s93 = sphi 0, %s90
      %s94 = sphi 0, %s93
      %s110 = sphi 0, %s94
    $region4: #{fashion_encoder_head_v2_fused.1} parent=1 // loop_header_branch
      %15 = sbr.rel (%p13) target = $region8
    $region5: #{fashion_encoder_head_v2_fused.1} parent=1 // loop_body
      %s17 = ssub.s32 %s12, 1
      %s18 = ssub.s32 %s12, 2
      %s19 = sadd.s32 %s12, 1
      %s20 = ssub.s32 %s12, %s19
      %p21 = scmp.eq.s32.totalorder %s20, 0
      %s23 = sadd.s32 %s22, 1
      %s24 = scalar_select %p21, %s22, %s23
      %p27 = pneg %p21
      %p28 = scmp.eq.s32.totalorder %s12, 2
      %p29 = por %p27, %p28
      %p30 = scmp.ne.s32.totalorder %s22, %s25
      %p31 = scmp.eq.s32.totalorder %s12, 0
      %p32 = por %p30, %p31
      %p33 = scmp.ne.s32.totalorder %s22, %s25
      %p34 = scmp.eq.s32.totalorder %s17, 2
      %p35 = por %p33, %p34
      %p36 = scmp.ne.s32.totalorder %s25, %s26
      %p37 = scmp.eq.s32.totalorder %s17, 0
      %p38 = por %p36, %p37
      %p39 = scmp.ne.s32.totalorder %s25, %s26
      %p40 = scmp.eq.s32.totalorder %s18, 2
      %p41 = por %p39, %p40
      %p43 = scmp.ne.s32.totalorder %s26, %s42
      %p44 = scmp.eq.s32.totalorder %s18, 0
      %p45 = por %p43, %p44
      %s47 = sadd.s32 %s46, 1
      %p50 = scmp.eq.s32.totalorder %s12, 2
      %p51 = scmp.ne.s32.totalorder %s46, %s48
      %p52 = scmp.eq.s32.totalorder %s12, 0
      %p53 = por %p51, %p52
      %p54 = scmp.ne.s32.totalorder %s46, %s48
      %p55 = scmp.eq.s32.totalorder %s17, 2
      %p56 = por %p54, %p55
      %p57 = scmp.ne.s32.totalorder %s48, %s49
      %p58 = scmp.eq.s32.totalorder %s17, 0
      %p59 = por %p57, %p58
      %p60 = scmp.ne.s32.totalorder %s48, %s49
      %p61 = scmp.eq.s32.totalorder %s18, 2
      %p62 = por %p60, %p61
      %p64 = scmp.ne.s32.totalorder %s49, %s63
      %p65 = scmp.eq.s32.totalorder %s18, 0
      %p66 = por %p64, %p65
      %s68 = sadd.s32 %s67, 1
      %p71 = scmp.eq.s32.totalorder %s12, 2
      %p72 = scmp.ne.s32.totalorder %s67, %s69
      %p73 = scmp.eq.s32.totalorder %s12, 0
      %p74 = por %p72, %p73
      %p75 = scmp.ne.s32.totalorder %s67, %s69
      %p76 = scmp.eq.s32.totalorder %s17, 2
      %p77 = por %p75, %p76
      %p78 = scmp.ne.s32.totalorder %s69, %s70
      %p79 = scmp.eq.s32.totalorder %s17, 0
      %p80 = por %p78, %p79
      %p81 = scmp.ne.s32.totalorder %s69, %s70
      %p82 = scmp.eq.s32.totalorder %s18, 2
      %p83 = por %p81, %p82
      %p85 = scmp.ne.s32.totalorder %s70, %s84
      %p86 = scmp.eq.s32.totalorder %s18, 0
      %p87 = por %p85, %p86
      %s88 = ssub.s32 %s12, %s19
      %p89 = scmp.eq.s32.totalorder %s88, 0
      %s91 = sadd.s32 %s90, 1
      %s92 = scalar_select %p89, %s90, %s91
      %p95 = pneg %p89
      %p96 = scmp.eq.s32.totalorder %s12, 2
      %p97 = por %p95, %p96
      %p98 = scmp.ne.s32.totalorder %s90, %s93
      %p99 = scmp.eq.s32.totalorder %s12, 0
      %p100 = por %p98, %p99
      %p101 = scmp.ne.s32.totalorder %s90, %s93
      %p102 = scmp.eq.s32.totalorder %s17, 2
      %p103 = por %p101, %p102
      %p104 = scmp.ne.s32.totalorder %s93, %s94
      %p105 = scmp.eq.s32.totalorder %s17, 0
      %p106 = por %p104, %p105
      %p107 = scmp.ne.s32.totalorder %s93, %s94
      %p108 = scmp.eq.s32.totalorder %s18, 2
      %p109 = por %p107, %p108
      %p111 = scmp.ne.s32.totalorder %s94, %s110
      %p112 = scmp.eq.s32.totalorder %s18, 0
      %p113 = por %p111, %p112
      %p114 = scmp.le.s32.totalorder 1, %s12
      %p115 = scmp.lt.s32.totalorder %s12, 4
      %p116 = pnand %p114, %p115
      %p117 = pneg %p116
      // Predicated region
      $region9: #{fashion_encoder_head_v2_fused.1} parent=5 // pred_check
        _
      $region10: #{fashion_encoder_head_v2_fused.1} parent=5 // pred_check_branch
        %119 = sbr.rel (%p116) target = $region12
      $region11: #{fashion_encoder_head_v2_fused.1} parent=5 // pred_region
        %s120 = ssub.s32 %s12, 1
        // Predicated region
        $region13: #{fashion_encoder_head_v2_fused.1} parent=11 // pred_check
          %p121 = pneg %p59
        $region14: #{fashion_encoder_head_v2_fused.1} parent=11 // pred_check_branch
          %123 = sbr.rel (%p121) target = $region16
        $region15: #{fashion_encoder_head_v2_fused.1} parent=11 // pred_region
          _
        $region16: #{fashion_encoder_head_v2_fused.1} parent=11 // pred_fallthru
          _
        // Predicated region
        $region17: #{fashion_encoder_head_v2_fused.1} parent=11 // pred_check
          %p124 = pneg %p80
        $region18: #{fashion_encoder_head_v2_fused.1} parent=11 // pred_check_branch
          %126 = sbr.rel (%p124) target = $region20
        $region19: #{fashion_encoder_head_v2_fused.1} parent=11 // pred_region
          _
        $region20: #{fashion_encoder_head_v2_fused.1} parent=11 // pred_fallthru
          _
      $region12: #{fashion_encoder_head_v2_fused.1} parent=5 // pred_fallthru
        _
      %p127 = scmp.lt.s32.totalorder %s12, 3
      // Predicated region
      $region21: #{fashion_encoder_head_v2_fused.1} parent=5 // pred_check
        %p128 = pneg %p127
      $region22: #{fashion_encoder_head_v2_fused.1} parent=5 // pred_check_branch
        %130 = sbr.rel (%p128) target = $region24
      $region23: #{fashion_encoder_head_v2_fused.1} parent=5 // pred_region
        // Predicated region
        $region25: #{fashion_encoder_head_v2_fused.1} parent=23 // pred_check
          %p131 = pneg %p32
        $region26: #{fashion_encoder_head_v2_fused.1} parent=23 // pred_check_branch
          %133 = sbr.rel (%p131) target = $region28
        $region27: #{fashion_encoder_head_v2_fused.1} parent=23 // pred_region
          %s134 = smul.u32 16, %s12
          %s135 = ssub.s32 38, %s134
          %p136 = scmp.lt.s32.totalorder %s135, 16
          %s137 = scalar_select %p136, %s135, 16
          %s138 = smul.u32 128, %s137
          %p139 = scmp.lt.s32.totalorder %s134, 37
          %s140 = scalar_select %p139, %s134, 37
          %s141 = smul.addr %s140, 8
          %s142 = scalar_lea.vmem %s0, %s141
          %s143 = smul.u32 16, %s12
          %s144 = ssub.s32 38, %s143
          %p145 = scmp.lt.s32.totalorder %s144, 16
          %s146 = scalar_select %p145, %s144, 16
          %s147 = smul.u32 128, %s146
        $region28: #{fashion_encoder_head_v2_fused.1} parent=23 // pred_fallthru
          _
      $region24: #{fashion_encoder_head_v2_fused.1} parent=5 // pred_fallthru
        _
      %p148 = scmp.le.s32.totalorder 1, %s12
      %p149 = scmp.lt.s32.totalorder %s12, 4
      %p150 = pnand %p148, %p149
      %p151 = pneg %p150
      // Predicated region
      $region29: #{fashion_encoder_head_v2_fused.1} parent=5 // pred_check
        _
      $region30: #{fashion_encoder_head_v2_fused.1} parent=5 // pred_check_branch
        %153 = sbr.rel (%p150) target = $region32
      $region31: #{fashion_encoder_head_v2_fused.1} parent=5 // pred_region
        %s154 = ssub.s32 %s12, 1
        %s155 = smul.u32 16, %s17
        %s156 = ssub.s32 38, %s155
        %p157 = scmp.lt.s32.totalorder %s156, 16
        %s158 = scalar_select %p157, %s156, 16
        %s159 = smul.u32 128, %s158
        %p160 = scmp.lt.s32.totalorder %s155, 37
        %s161 = scalar_select %p160, %s155, 37
        %s162 = smul.addr %s161, 8
        %s163 = scalar_lea.vmem %s0, %s162
        %p164 = pneg %p38
        %p165 = pneg %p35
        %p166 = pneg %p59
        %p167 = pneg %p56
        %p168 = pneg %p80
        %p169 = pneg %p77
        %p170 = pneg %p106
        %p171 = pneg %p103
        %s172 = sand.u32 %s93, 1
        %s173 = scalar_lea.sflag [#allocation3], %s172
        %s174 = sand.u32 %s93, 1
        %s175 = smul.addr %s174, 256
        %s176 = scalar_lea.vmem [#allocation2], %s175
        %s177 = smul.u32 16, %s17
        %s178 = ssub.s32 38, %s177
        %p179 = scmp.lt.s32.totalorder %s178, 16
        %s180 = scalar_select %p179, %s178, 16
        %s181 = smul.u32 128, %s180
        %p182 = scmp.lt.s32.totalorder %s177, 37
        %s183 = scalar_select %p182, %s177, 37
        %s184 = smul.addr %s183, 8
        %s185 = scalar_lea.vmem %s0, %s184
        %s186 = smul.u32 16, %s17
        %s187 = ssub.s32 38, %s186
        %p188 = scmp.lt.s32.totalorder %s187, 16
        %s189 = scalar_select %p188, %s187, 16
        %s190 = smul.u32 128, %s189
        %s191 = smul.u32 16, %s17
        %s192 = ssub.s32 38, %s191
        %p193 = scmp.lt.s32.totalorder %s192, 16
        %s194 = scalar_select %p193, %s192, 16
        %s195 = smul.u32 128, %s194
        %s196 = smul.u32 %s195, 2
        %v198 = vld [vmem:[%s185] sm:$0xff]
        %v199 = vld [vmem:[%s185 + $0x8] sm:$0xff]
        %v200 = vld [vmem:[%s185 + $0x10] sm:$0xff]
        %v201 = vld [vmem:[%s185 + $0x18] sm:$0xff]
        %v202 = vld [vmem:[%s185 + $0x20] sm:$0xff]
        %v203 = vld [vmem:[%s185 + $0x28] sm:$0xff]
        %v204 = vld [vmem:[%s185 + $0x30] sm:$0xff]
        %v205 = vld [vmem:[%s185 + $0x38] sm:$0xff]
        %v206 = vld [vmem:[%s185 + $0x40] sm:$0xff]
        %v207 = vld [vmem:[%s185 + $0x48] sm:$0xff]
        %v208 = vld [vmem:[%s185 + $0x50] sm:$0xff]
        %v209 = vld [vmem:[%s185 + $0x58] sm:$0xff]
        %v210 = vld [vmem:[%s185 + $0x60] sm:$0xff]
        %v211 = vld [vmem:[%s185 + $0x68] sm:$0xff]
        %v212 = vld [vmem:[%s185 + $0x70] sm:$0xff]
        %v213 = vld [vmem:[%s185 + $0x78] sm:$0xff]
        %v214 = vpack.c.bf16 %v199, %v198
        %v215 = vpack.c.bf16 %v201, %v200
        %v216 = vpack.c.bf16 %v203, %v202
        %v217 = vpack.c.bf16 %v205, %v204
        %v218 = vpack.c.bf16 %v207, %v206
        %v219 = vpack.c.bf16 %v209, %v208
        %v220 = vpack.c.bf16 %v211, %v210
        %v221 = vpack.c.bf16 %v213, %v212
        %v222 = vld [vmem:[%s1] sm:$0xff]
        %v223 = vld [vmem:[%s1 + $0x8] sm:$0xff]
        %v224 = vld [vmem:[%s1 + $0x10] sm:$0xff]
        %v225 = vld [vmem:[%s1 + $0x18] sm:$0xff]
        %v226 = vld [vmem:[%s1 + $0x20] sm:$0xff]
        %v227 = vld [vmem:[%s1 + $0x28] sm:$0xff]
        %v228 = vld [vmem:[%s1 + $0x30] sm:$0xff]
        %v229 = vld [vmem:[%s1 + $0x38] sm:$0xff]
        %v230 = vld [vmem:[%s2] sm:$0x3]
        %v232 = vlaneseq
        %v233 = vshrl.u32 %v232, 7
        %v234 = vsub.s32 0, %v233
        %v235 = vrot.slane %v230, %v234
        %v236 = vlaneseq
        %v237 = vshrl.u32 %v236, 7
        %v238 = vsub.s32 1, %v237
        %v239 = vrot.slane %v230, %v238
        %v250 = vunpack.c.l.b16 %v222
        %v251 = vunpack.c.h.b16 %v222
        %v252 = vunpack.c.l.b16 %v223
        %v253 = vunpack.c.h.b16 %v223
        %v254 = vunpack.c.l.b16 %v224
        %v255 = vunpack.c.h.b16 %v224
        %v256 = vunpack.c.l.b16 %v225
        %v257 = vunpack.c.h.b16 %v225
        %v258 = vunpack.c.l.b16 %v226
        %v259 = vunpack.c.h.b16 %v226
        %v260 = vunpack.c.l.b16 %v227
        %v261 = vunpack.c.h.b16 %v227
        %v262 = vunpack.c.l.b16 %v228
        %v263 = vunpack.c.h.b16 %v228
        %v264 = vunpack.c.l.b16 %v229
        %v265 = vunpack.c.h.b16 %v229
        %v266 = vpack.c.b16 %v252, %v250
        %v267 = vpack.c.b16 %v253, %v251
        %v268 = vpack.c.b16 %v256, %v254
        %v269 = vpack.c.b16 %v257, %v255
        %v270 = vpack.c.b16 %v260, %v258
        %v271 = vpack.c.b16 %v261, %v259
        %v272 = vpack.c.b16 %v264, %v262
        %v273 = vpack.c.b16 %v265, %v263
        %vm282 = vcmask 523264
        %v284 = vsel %vm282, %v214, 0
        %v287 = vsel %vm282, %v215, 0
        %v290 = vsel %vm282, %v216, 0
        %v293 = vsel %vm282, %v217, 0
        %v296 = vsel %vm282, %v218, 0
        %v299 = vsel %vm282, %v219, 0
        %v302 = vsel %vm282, %v220, 0
        %v305 = vsel %vm282, %v221, 0
        %307 = vmatprep.subr.bf16.mxu0 0
        %308 = vmatpush1.bf16.msra.mxu0 0
        %309 = vmatprep.subr.bf16.mxu0 0
        %310 = vmatpush1.bf16.msra.mxu0 0
        %311 = vmatprep.subr.bf16.mxu0 0
        %312 = vmatpush1.bf16.msra.mxu0 0
        %313 = vmatprep.subr.bf16.mxu0 0
        %314 = vmatpush1.bf16.msra.mxu0 0
        %315 = vmatprep.subr.bf16.mxu0 %v273
        %316 = vmatpush1.bf16.msra.mxu0 %v272
        %317 = vmatprep.subr.bf16.mxu0 %v271
        %318 = vmatpush1.bf16.msra.mxu0 %v270
        %319 = vmatprep.subr.bf16.mxu0 %v269
        %320 = vmatpush1.bf16.msra.mxu0 %v268
        %321 = vmatprep.subr.bf16.mxu0 %v267
        %322 = vmatpush1.bf16.msra.mxu0 %v266
        %323 = vmatprep.subr.bf16.mxu0 0
        %324 = vmatpush2.bf16.msra.mxu0 0
        %325 = vmatprep.subr.bf16.mxu0 0
        %326 = vmatpush2.bf16.msra.mxu0 0
        %327 = vmatprep.subr.bf16.mxu0 0
        %328 = vmatpush2.bf16.msra.mxu0 0
        %329 = vmatprep.subr.bf16.mxu0 0
        %330 = vmatpush2.bf16.msra.mxu0 0
        %331 = vmatprep.subr.bf16.mxu0 0
        %332 = vmatpush2.bf16.msra.mxu0 0
        %333 = vmatprep.subr.bf16.mxu0 0
        %334 = vmatpush2.bf16.msra.mxu0 0
        %335 = vmatprep.subr.bf16.mxu0 0
        %336 = vmatpush2.bf16.msra.mxu0 0
        %337 = vmatprep.subr.bf16.mxu0 0
        %338 = vmatpush2.bf16.msra.mxu0 0
        %339 = vmatprep.mubr.bf16.mxu0 0
        %340 = vmatmul.mubr.bf16.gmra.mxu0 %v284
        %v341 = vpop.f32.mrf.mxu0
        %v342 = vadd.f32 %v235, %v341
        %v343 = vpop.f32.mrf.mxu0
        %v344 = vadd.f32 %v239, %v343
        %v345 = vpop.f32.mrf.mxu0
        %v346 = vadd.f32 %v235, %v345
        %v347 = vpop.f32.mrf.mxu0
        %v348 = vadd.f32 %v239, %v347
        %349 = vmatprep.mubr.bf16.mxu0 0
        %350 = vmatmul.mubr.bf16.gmra.mxu0 %v287
        %v351 = vpop.f32.mrf.mxu0
        %v352 = vadd.f32 %v235, %v351
        %v353 = vpop.f32.mrf.mxu0
        %v354 = vadd.f32 %v239, %v353
        %v355 = vpop.f32.mrf.mxu0
        %v356 = vadd.f32 %v235, %v355
        %v357 = vpop.f32.mrf.mxu0
        %v358 = vadd.f32 %v239, %v357
        %359 = vmatprep.mubr.bf16.mxu0 0
        %360 = vmatmul.mubr.bf16.gmra.mxu0 %v290
        %v361 = vpop.f32.mrf.mxu0
        %v362 = vadd.f32 %v235, %v361
        %v363 = vpop.f32.mrf.mxu0
        %v364 = vadd.f32 %v239, %v363
        %v365 = vpop.f32.mrf.mxu0
        %v366 = vadd.f32 %v235, %v365
        %v367 = vpop.f32.mrf.mxu0
        %v368 = vadd.f32 %v239, %v367
        %369 = vmatprep.mubr.bf16.mxu0 0
        %370 = vmatmul.mubr.bf16.gmra.mxu0 %v293
        %v371 = vpop.f32.mrf.mxu0
        %v372 = vadd.f32 %v235, %v371
        %v373 = vpop.f32.mrf.mxu0
        %v374 = vadd.f32 %v239, %v373
        %v375 = vpop.f32.mrf.mxu0
        %v376 = vadd.f32 %v235, %v375
        %v377 = vpop.f32.mrf.mxu0
        %v378 = vadd.f32 %v239, %v377
        %379 = vmatprep.mubr.bf16.mxu0 0
        %380 = vmatmul.mubr.bf16.gmra.mxu0 %v296
        %v381 = vpop.f32.mrf.mxu0
        %v382 = vadd.f32 %v235, %v381
        %v383 = vpop.f32.mrf.mxu0
        %v384 = vadd.f32 %v239, %v383
        %v385 = vpop.f32.mrf.mxu0
        %v386 = vadd.f32 %v235, %v385
        %v387 = vpop.f32.mrf.mxu0
        %v388 = vadd.f32 %v239, %v387
        %389 = vmatprep.mubr.bf16.mxu0 0
        %390 = vmatmul.mubr.bf16.gmra.mxu0 %v299
        %v391 = vpop.f32.mrf.mxu0
        %v392 = vadd.f32 %v235, %v391
        %v393 = vpop.f32.mrf.mxu0
        %v394 = vadd.f32 %v239, %v393
        %v395 = vpop.f32.mrf.mxu0
        %v396 = vadd.f32 %v235, %v395
        %v397 = vpop.f32.mrf.mxu0
        %v398 = vadd.f32 %v239, %v397
        %399 = vmatprep.mubr.bf16.mxu0 0
        %400 = vmatmul.mubr.bf16.gmra.mxu0 %v302
        %v401 = vpop.f32.mrf.mxu0
        %v402 = vadd.f32 %v235, %v401
        %v403 = vpop.f32.mrf.mxu0
        %v404 = vadd.f32 %v239, %v403
        %v405 = vpop.f32.mrf.mxu0
        %v406 = vadd.f32 %v235, %v405
        %v407 = vpop.f32.mrf.mxu0
        %v408 = vadd.f32 %v239, %v407
        %409 = vmatprep.mubr.bf16.mxu0 0
        %410 = vmatmul.mubr.bf16.gmra.mxu0 %v305
        %v411 = vpop.f32.mrf.mxu0
        %v412 = vadd.f32 %v235, %v411
        %v413 = vpop.f32.mrf.mxu0
        %v414 = vadd.f32 %v239, %v413
        %v415 = vpop.f32.mrf.mxu0
        %v416 = vadd.f32 %v235, %v415
        %v417 = vpop.f32.mrf.mxu0
        %v418 = vadd.f32 %v239, %v417
        %419 = vdwg.mxu0
        %420 = vst [vmem:[%s176] sm:$0xff] %v342
        %421 = vst [vmem:[%s176 + $0x8] sm:$0xff] %v344
        %422 = vst [vmem:[%s176 + $0x10] sm:$0xff] %v346
        %423 = vst [vmem:[%s176 + $0x18] sm:$0xff] %v348
        %424 = vst [vmem:[%s176 + $0x20] sm:$0xff] %v352
        %425 = vst [vmem:[%s176 + $0x28] sm:$0xff] %v354
        %426 = vst [vmem:[%s176 + $0x30] sm:$0xff] %v356
        %427 = vst [vmem:[%s176 + $0x38] sm:$0xff] %v358
        %428 = vst [vmem:[%s176 + $0x40] sm:$0xff] %v362
        %429 = vst [vmem:[%s176 + $0x48] sm:$0xff] %v364
        %430 = vst [vmem:[%s176 + $0x50] sm:$0xff] %v366
        %431 = vst [vmem:[%s176 + $0x58] sm:$0xff] %v368
        %432 = vst [vmem:[%s176 + $0x60] sm:$0xff] %v372
        %433 = vst [vmem:[%s176 + $0x68] sm:$0xff] %v374
        %434 = vst [vmem:[%s176 + $0x70] sm:$0xff] %v376
        %435 = vst [vmem:[%s176 + $0x78] sm:$0xff] %v378
        %436 = vst [vmem:[%s176 + $0x80] sm:$0xff] %v382
        %437 = vst [vmem:[%s176 + $0x88] sm:$0xff] %v384
        %438 = vst [vmem:[%s176 + $0x90] sm:$0xff] %v386
        %439 = vst [vmem:[%s176 + $0x98] sm:$0xff] %v388
        %440 = vst [vmem:[%s176 + $0xa0] sm:$0xff] %v392
        %441 = vst [vmem:[%s176 + $0xa8] sm:$0xff] %v394
        %442 = vst [vmem:[%s176 + $0xb0] sm:$0xff] %v396
        %443 = vst [vmem:[%s176 + $0xb8] sm:$0xff] %v398
        %444 = vst [vmem:[%s176 + $0xc0] sm:$0xff] %v402
        %445 = vst [vmem:[%s176 + $0xc8] sm:$0xff] %v404
        %446 = vst [vmem:[%s176 + $0xd0] sm:$0xff] %v406
        %447 = vst [vmem:[%s176 + $0xd8] sm:$0xff] %v408
        %448 = vst [vmem:[%s176 + $0xe0] sm:$0xff] %v412
        %449 = vst [vmem:[%s176 + $0xe8] sm:$0xff] %v414
        %450 = vst [vmem:[%s176 + $0xf0] sm:$0xff] %v416
        %451 = vst [vmem:[%s176 + $0xf8] sm:$0xff] %v418
        %s452 = sand.u32 %s93, 1
        %s453 = scalar_lea.sflag [#allocation3], %s452
        %s454 = sand.u32 %s93, 1
        %s455 = smul.addr %s454, 256
        %s456 = scalar_lea.vmem [#allocation2], %s455
        // Predicated region
        $region33: #{fashion_encoder_head_v2_fused.1} parent=31 // pred_check
          %p457 = pneg %p103
        $region34: #{fashion_encoder_head_v2_fused.1} parent=31 // pred_check_branch
          %459 = sbr.rel (%p457) target = $region36
        $region35: #{fashion_encoder_head_v2_fused.1} parent=31 // pred_region
          %s460 = smul.u32 16, %s17
          %s461 = ssub.s32 38, %s460
          %p462 = scmp.lt.s32.totalorder %s461, 16
          %s463 = scalar_select %p462, %s461, 16
          %s464 = smul.u32 128, %s463
          %s465 = smul.u32 %s464, 2
          %s467 = ssub.s32 4096, %s465
          %468 = vsyncadd %s453, %s467
          %p469 = scmp.ne.s32.totalorder 0, %s465
          %s470 = smul.addr %s460, 2
          %s471 = smul.addr %s470, 128
          %s472 = scalar_lea.hbm %s3, %s471
          %s473 = smul.u32 16, %s463
          %s474 = sshll.u32 %s456, 4
          %s475 = int_to_ptr.vmem [resolvable:$true] %s474
          %s476 = sshll.u32 %s473, 4
          %480 = dma.vmem_to_hbm [thread:$0]  (%p469), %s475, %s476, %s472, %s453, 256, 256, 16
        $region36: #{fashion_encoder_head_v2_fused.1} parent=31 // pred_fallthru
          _
      $region32: #{fashion_encoder_head_v2_fused.1} parent=5 // pred_fallthru
        _
      %p481 = scmp.le.s32.totalorder 2, %s12
      // Predicated region
      $region37: #{fashion_encoder_head_v2_fused.1} parent=5 // pred_check
        %p482 = pneg %p481
      $region38: #{fashion_encoder_head_v2_fused.1} parent=5 // pred_check_branch
        %484 = sbr.rel (%p482) target = $region40
      $region39: #{fashion_encoder_head_v2_fused.1} parent=5 // pred_region
        %s485 = ssub.s32 %s12, 2
        // Predicated region
        $region41: #{fashion_encoder_head_v2_fused.1} parent=39 // pred_check
          %p486 = pneg %p109
        $region42: #{fashion_encoder_head_v2_fused.1} parent=39 // pred_check_branch
          %488 = sbr.rel (%p486) target = $region44
        $region43: #{fashion_encoder_head_v2_fused.1} parent=39 // pred_region
          %s489 = sand.u32 %s94, 1
          %s490 = scalar_lea.sflag [#allocation3], %s489
          %s491 = sand.u32 %s94, 1
          %s492 = smul.addr %s491, 256
          %s493 = scalar_lea.vmem [#allocation2], %s492
          %494 = dma.done %s490, 4096
        $region44: #{fashion_encoder_head_v2_fused.1} parent=39 // pred_fallthru
          _
      $region40: #{fashion_encoder_head_v2_fused.1} parent=5 // pred_fallthru
        _
    $region6: #{fashion_encoder_head_v2_fused.1} parent=1 // loop_footer
      %s16 = sadd.s32 1, %s12
    $region7: #{fashion_encoder_head_v2_fused.1} parent=1 // loop_footer_branch
      %11 = sbr.rel target = $region3
    $region8: #{fashion_encoder_head_v2_fused.1} parent=1 // loop_exit
      _
    %495 = vsyncpa [#allocation3], 1
    %s496 = scalar_lea.sflag [#allocation3], 1
    %497 = vsyncpa %s496, 1

</llo_original>
